<compile_context>
chip_gen: v5e
topology: v5e:2x2
jax: 0.10.0
libtpu: 0.0.40
codegen_flags: <defaults>
</compile_context>

<pallas_src>
import math

import jax
import jax.numpy as jnp
from jax.experimental import pallas as pl
from jax.experimental.pallas import tpu as pltpu


def _cdiv(a, b):
    return -(-a // b)


def _round_up(a, b):
    return _cdiv(a, b) * b


# ---------------------------------------------------------------------------
# Kernel
# ---------------------------------------------------------------------------
def siren_filter_kernel(x_ref, w_ref, b_ref, z_ref, o_ref):
    # Fused hot path: Wx = x @ W_blk (+ bias), then sin(z + Wx), all in VMEM.
    wx = jnp.dot(x_ref[...], w_ref[...], preferred_element_type=jnp.float32)
    wx = wx + b_ref[...]  # (1, Nf) broadcast over rows, hoisted once per tile
    o_ref[...] = jnp.sin(z_ref[...].astype(jnp.float32) + wx).astype(o_ref.dtype)


# ---------------------------------------------------------------------------
# Parameter preparation (hoisted out of the per-call path — call once)
# ---------------------------------------------------------------------------
def plan_siren_filter(c_out):
    """Static lane-density plan: padded channel count and row fold factor."""
    if c_out >= 128:
        c_pad = _round_up(c_out, 128)     # lane-dense multiple of 128
        fold = 1
    else:
        c_pad = pl.next_power_of_2(c_out)  # divides 128 (power of 2 <= 128)
        fold = 128 // c_pad                # exactly 128 lanes; never over-fold
    return c_pad, fold


def prepare_siren_filter_params(weight_t, bias):
    """Build the block-diagonal weight / tiled bias once (kron, tile, pad)."""
    c_in, c_out = weight_t.shape
    c_pad, fold = plan_siren_filter(c_out)
    if c_pad != c_out:
        weight_t = jnp.pad(weight_t, ((0, 0), (0, c_pad - c_out)))
        bias = jnp.pad(bias, (0, c_pad - c_out))
    if fold > 1:
        w_blk = jnp.kron(jnp.eye(fold, dtype=weight_t.dtype), weight_t)
        b_blk = jnp.tile(bias, fold)
    else:
        w_blk, b_blk = weight_t, bias
    return {
        "w_blk": w_blk,                    # (fold*c_in, fold*c_pad)
        "b_blk": b_blk.reshape(1, -1),     # (1, fold*c_pad)
        "c_in": c_in,
        "c_out": c_out,
        "c_pad": c_pad,
        "fold": fold,
    }


# ---------------------------------------------------------------------------
# Wrapper
# ---------------------------------------------------------------------------
def _choose_row_tile(mf, block_rows):
    """Pick the folded-row tile size.

    For tiny inputs use a single full tile.  Otherwise force an even number of
    tiles (>= 2) so v7x's two TensorCores stay balanced, with each tile capped
    near `block_rows` and rounded to a sublane multiple of 8.
    """
    if mf <= 512:
        return mf
    n_tiles = _cdiv(mf, block_rows)
    if n_tiles < 2:
        n_tiles = 2
    elif n_tiles % 2:
        n_tiles += 1
    return _round_up(_cdiv(mf, n_tiles), 8)


def siren_filter(x, z, params, *, block_rows=4096):
    """x: [M, c_in], z: [M, c_out], params from prepare_siren_filter_params."""
    w_blk, b_blk = params["w_blk"], params["b_blk"]
    c_in, c_out = params["c_in"], params["c_out"]
    c_pad, fold = params["c_pad"], params["fold"]

    M = x.shape[0]
    assert x.shape == (M, c_in) and z.shape == (M, c_out)
    out_dtype = jnp.result_type(x.dtype, z.dtype)

    # Pad rows to a multiple of the fold factor (never fall back to the
    # lane-sparse path), and pad z columns to the lane-dense channel count.
    m_padded = _round_up(M, fold)
    if m_padded != M:
        x = jnp.pad(x, ((0, m_padded - M), (0, 0)))
        z = jnp.pad(z, ((0, m_padded - M), (0, 0)))
    if c_pad != c_out:
        z = jnp.pad(z, ((0, 0), (0, c_pad - c_out)))

    Mf = m_padded // fold
    Kf = fold * c_in
    Nf = fold * c_pad                       # 128 when c_out < 128
    x_use = x.reshape(Mf, Kf)               # free row-major views
    z_use = z.reshape(Mf, Nf)

    tm = _choose_row_tile(Mf, block_rows)
    grid = (_cdiv(Mf, tm),)

    # VMEM budget check: only raise the scoped limit when the double-buffered
    # working set would not fit v5e's 16 MiB default.
    x_isize = jnp.dtype(x_use.dtype).itemsize
    z_isize = jnp.dtype(z_use.dtype).itemsize
    w_isize = jnp.dtype(w_blk.dtype).itemsize
    o_isize = jnp.dtype(out_dtype).itemsize
    tile_bytes = tm * (Kf * x_isize + Nf * z_isize + Nf * o_isize)
    resident_bytes = Kf * Nf * w_isize + Nf * jnp.dtype(b_blk.dtype).itemsize
    vmem_needed = 2 * tile_bytes + resident_bytes
    vmem_limit = None
    if vmem_needed > (12 << 20):
        vmem_limit = min(int(vmem_needed * 1.5) + (2 << 20), 40 << 20)

    out = pl.pallas_call(
        siren_filter_kernel,
        out_shape=jax.ShapeDtypeStruct((Mf, Nf), out_dtype),
        grid_spec=pltpu.PrefetchScalarGridSpec(
            num_scalar_prefetch=0,
            grid=grid,
            in_specs=[
                pl.BlockSpec((tm, Kf), lambda i: (i, 0)),   # x tile (streamed)
                pl.BlockSpec((Kf, Nf), lambda i: (0, 0)),   # weight (resident)
                pl.BlockSpec((1, Nf), lambda i: (0, 0)),    # bias   (resident)
                pl.BlockSpec((tm, Nf), lambda i: (i, 0)),   # z tile (streamed)
            ],
            out_specs=pl.BlockSpec((tm, Nf), lambda i: (i, 0)),
        ),
        compiler_params=pltpu.CompilerParams(
            # Row tiles are independent -> shard across TensorCores on v7x.
            dimension_semantics=("parallel",),
            vmem_limit_bytes=vmem_limit,
        ),
        cost_estimate=pl.CostEstimate(
            flops=2 * Mf * Kf * Nf,
            transcendentals=Mf * Nf,
            bytes_accessed=(Mf * Kf * x_isize
                            + Kf * Nf * w_isize
                            + Mf * Nf * z_isize
                            + Mf * Nf * o_isize),
        ),
    )(x_use, w_blk, b_blk, z_use)

    out = out.reshape(m_padded, c_pad)
    if m_padded != M or c_pad != c_out:
        out = out[:M, :c_out]
    return out


# ---------------------------------------------------------------------------
# Init / reference
# ---------------------------------------------------------------------------
def init_siren_filter_params(key, in_channels, interm_channels, scale=1.0):
    """Deterministic init matching nn.Linear defaults + SIRENFilter tweaks."""
    kw, kb = jax.random.split(key)
    bound = 1.0 / math.sqrt(in_channels)
    # nn.Linear weight: U(-1/sqrt(in), 1/sqrt(in)), then *= scale
    weight = jax.random.uniform(
        kw, (interm_channels, in_channels), jnp.float32, -bound, bound
    ) * scale
    # SIRENFilter bias: U(-pi, pi)
    bias = jax.random.uniform(
        kb, (interm_channels,), jnp.float32, -math.pi, math.pi
    )
    # Store transposed (C_in, C_out) so the kernel does x @ W directly.
    return weight.T, bias


def siren_filter_reference(x, z, weight_t, bias):
    return jnp.sin(z + x @ weight_t + bias)


if __name__ == "__main__":
    key = jax.random.PRNGKey(0)
    k_params, k_x, k_z, k_x2, k_z2, k_p3, k_x3, k_z3 = jax.random.split(key, 8)

    in_channels, interm_channels = 4, 32
    scale = 1.0
    weight_t, bias = init_siren_filter_params(
        k_params, in_channels, interm_channels, scale
    )
    # Hoisted weight/bias blocking — done once, reused for every forward.
    params = prepare_siren_filter_params(weight_t, bias)

    # --- Small case consistent with the module (batch=2, seq=8) ---
    B, S = 2, 8
    x = jax.random.normal(k_x, (B, S, in_channels), jnp.float32)
    z = jax.random.normal(k_z, (B, S, interm_channels), jnp.float32)

    x2d = x.reshape(B * S, in_channels)   # Linear acts on the last dim
    z2d = z.reshape(B * S, interm_channels)

    out2d = siren_filter(x2d, z2d, params)
    out = out2d.reshape(B, S, interm_channels)
    jax.block_until_ready(out)

    ref = siren_filter_reference(x2d, z2d, weight_t, bias).reshape(
        B, S, interm_channels
    )
    assert jnp.allclose(out, ref, atol=1e-5, rtol=1e-5), "mismatch (small case)"

    # --- Larger case to exercise the multi-tile pipelined (even) grid path ---
    M_big = 8192
    xb = jax.random.normal(k_x2, (M_big, in_channels), jnp.float32)
    zb = jax.random.normal(k_z2, (M_big, interm_channels), jnp.float32)
    outb = siren_filter(xb, zb, params)
    jax.block_until_ready(outb)
    refb = siren_filter_reference(xb, zb, weight_t, bias)
    assert jnp.allclose(outb, refb, atol=1e-5, rtol=1e-5), "mismatch (tiled case)"

    # --- Irregular case: M not a multiple of the fold, C_out not a power of 2
    # --- (exercises the row/column zero-padding path instead of falling back
    # --- to lane-sparse stores).
    in3, out3, M3 = 3, 24, 1003
    weight_t3, bias3 = init_siren_filter_params(k_p3, in3, out3, scale)
    params3 = prepare_siren_filter_params(weight_t3, bias3)
    xc = jax.random.normal(k_x3, (M3, in3), jnp.float32)
    zc = jax.random.normal(k_z3, (M3, out3), jnp.float32)
    outc = siren_filter(xc, zc, params3)
    jax.block_until_ready(outc)
    refc = siren_filter_reference(xc, zc, weight_t3, bias3)
    assert jnp.allclose(outc, refc, atol=1e-5, rtol=1e-5), "mismatch (padded case)"

    # TODO(synk): the PyTorch `use_cached` path (self._Wx memoization) is host-side
    # state, not kernel compute; callers can cache Wx outside the kernel if needed.

    print("KERNEL_OK")
</pallas_src>

<mosaic_0001>
module attributes {stable_mosaic.version = 11 : i64} {
  func.func @siren_filter_kernel(%arg0: i32, %arg1: memref<4x16xf32, #tpu.memory_space<vmem>>, %arg2: memref<16x128xf32, #tpu.memory_space<vmem>>, %arg3: memref<1x128xf32, #tpu.memory_space<vmem>>, %arg4: memref<4x128xf32, #tpu.memory_space<vmem>>, %arg5: memref<4x128xf32, #tpu.memory_space<vmem>>) attributes {dimension_semantics = [#tpu.dimension_semantics<parallel>], iteration_bounds = array<i64: 1>, scalar_prefetch = 0 : i64, scratch_operands = 0 : i64, tpu.core_type = #tpu.core_type<tc>, window_params = [{transform_indices = @transform_0, window_bounds = array<i64: 4, 16>}, {pipeline_mode = #tpu.pipeline_mode<synchronous>, transform_indices = @transform_1, window_bounds = array<i64: 16, 128>}, {pipeline_mode = #tpu.pipeline_mode<synchronous>, transform_indices = @transform_2, window_bounds = array<i64: 1, 128>}, {transform_indices = @transform_3, window_bounds = array<i64: 4, 128>}, {transform_indices = @transform_4, window_bounds = array<i64: 4, 128>}]} {
    %c0 = arith.constant 0 : index
    %c0_0 = arith.constant 0 : index
    %0 = vector.load %arg1[%c0, %c0_0] : memref<4x16xf32, #tpu.memory_space<vmem>>, vector<4x16xf32>
    %c0_1 = arith.constant 0 : index
    %c0_2 = arith.constant 0 : index
    %1 = vector.load %arg2[%c0_1, %c0_2] : memref<16x128xf32, #tpu.memory_space<vmem>>, vector<16x128xf32>
    %cst = arith.constant dense<0.000000e+00> : vector<4x128xf32>
    %2 = tpu.matmul %0, %1, %cst {dimension_numbers = #tpu.dot_dimension_numbers<[1], [0], [0], [1], [0, 0, 1, 1], [], []>} : vector<4x16xf32>, vector<16x128xf32>, vector<4x128xf32> -> vector<4x128xf32>
    %c0_3 = arith.constant 0 : index
    %c0_4 = arith.constant 0 : index
    %3 = vector.load %arg3[%c0_3, %c0_4] : memref<1x128xf32, #tpu.memory_space<vmem>>, vector<1x128xf32>
    %4 = vector.broadcast %3 : vector<1x128xf32> to vector<4x128xf32>
    %5 = arith.addf %2, %4 : vector<4x128xf32>
    %c0_5 = arith.constant 0 : index
    %c0_6 = arith.constant 0 : index
    %6 = vector.load %arg4[%c0_5, %c0_6] : memref<4x128xf32, #tpu.memory_space<vmem>>, vector<4x128xf32>
    %7 = arith.addf %6, %5 : vector<4x128xf32>
    %8 = math.sin %7 : vector<4x128xf32>
    %c0_7 = arith.constant 0 : index
    %c0_8 = arith.constant 0 : index
    %9 = vector.load %arg5[%c0_7, %c0_8] : memref<4x128xf32, #tpu.memory_space<vmem>>, vector<4x128xf32>
    tpu.vector_store %arg5[%c0_7, %c0_8], %8 {strides = array<i32>} : memref<4x128xf32, #tpu.memory_space<vmem>>, vector<4x128xf32>,
    return
  }
  func.func @transform_0(%arg0: i32) -> (i32, i32) {
    %c0_i32 = arith.constant 0 : i32
    %c0_i32_0 = arith.constant 0 : i32
    return %arg0, %c0_i32 : i32, i32
  }
  func.func @transform_1(%arg0: i32) -> (i32, i32) {
    %c0_i32 = arith.constant 0 : i32
    %c0_i32_0 = arith.constant 0 : i32
    %c0_i32_1 = arith.constant 0 : i32
    return %c0_i32, %c0_i32_0 : i32, i32
  }
  func.func @transform_2(%arg0: i32) -> (i32, i32) {
    %c0_i32 = arith.constant 0 : i32
    %c0_i32_0 = arith.constant 0 : i32
    %c0_i32_1 = arith.constant 0 : i32
    return %c0_i32, %c0_i32_0 : i32, i32
  }
  func.func @transform_3(%arg0: i32) -> (i32, i32) {
    %c0_i32 = arith.constant 0 : i32
    %c0_i32_0 = arith.constant 0 : i32
    return %arg0, %c0_i32 : i32, i32
  }
  func.func @transform_4(%arg0: i32) -> (i32, i32) {
    %c0_i32 = arith.constant 0 : i32
    %c0_i32_0 = arith.constant 0 : i32
    return %arg0, %c0_i32 : i32, i32
  }
}

</mosaic_0001>

<llo_original>
// kernel: tpu_custom_call.1
$region0: #{tpu_custom_call.1}
  #allocation0 [shape = 'u32[]', space=smem, size = 0x4, offset = 0x4, fixed_abs, tag = 'smem constant byte address 0x4 - core index']
  #allocation1 [shape = 'u32[72,128]{1,0:T(1,128)}', space=vmem, size = 0x9000, scoped, tag = 'internal scratch']
  %s0 = inlined_call_operand.hbm [shape: f32[4,16], index: 0, kind: input, shape index: {}]
  %s1 = inlined_call_operand.hbm [shape: f32[16,128], index: 1, kind: input, shape index: {}]
  %s2 = inlined_call_operand.vmem [shape: f32[1,128], index: 2, kind: input, shape index: {}]
  %s3 = inlined_call_operand.hbm [shape: f32[4,128], index: 3, kind: input, shape index: {}]
  %s4 = inlined_call_operand.hbm [shape: f32[4,128], index: 4, kind: output, shape index: {}]
  %s5 = sld [smem:[#allocation0]]
  $region38: #{tpu_custom_call.1} parent=0
    _
  %s7 = ssub.s32 1, %s5
  %s8 = scalar_select 0, %s7, %s5
  $region1: #{tpu_custom_call.1} parent=0
    #allocation2 [shape = 'u8[2048]{0}', space=vmem, size = 0x800, scoped, tag = 'input window, operand 0, single buffered']
    #allocation3 [shape = 's32[1]{0}', space=sflag, size = 0x4, scoped, tag = 'scoped memory for tpu_custom_call.1']
    #allocation4 [shape = 's32[1]{0}', space=sflag, size = 0x4, scoped, tag = 'scoped memory for tpu_custom_call.1']
    #allocation5 [shape = 'u8[8192]{0}', space=vmem, size = 0x2000, scoped, tag = 'input window, operand 1, single buffered']
    #allocation6 [shape = 's32[1]{0}', space=sflag, size = 0x4, scoped, tag = 'scoped memory for tpu_custom_call.1']
    #allocation7 [shape = 'u8[2048]{0}', space=vmem, size = 0x800, scoped, tag = 'input window, operand 3, single buffered']
    #allocation8 [shape = 'u8[2048]{0}', space=vmem, size = 0x800, scoped, tag = 'output window, operand 0, single buffered']
    %9 = vsyncpa [#allocation3], 0
    %10 = vsyncpa [#allocation6], 0
    %11 = vsyncpa [#allocation4], 0
    // Predicated region
    $region2: #{tpu_custom_call.1} parent=1 // pred_check
      _
    $region3: #{tpu_custom_call.1} parent=1 // pred_check_branch
      %13 = sbr.rel (0) target = $region5
    $region4: #{tpu_custom_call.1} parent=1 // pred_region
      %15 = vsyncadd [#allocation3], 0
      %s17 = sshll.u32 %s0, 4
      %s18 = int_to_ptr.hbm [resolvable:$true] %s17
      %s19 = sshll.u32 [#allocation2], 4
      %s20 = int_to_ptr.vmem [resolvable:$true] %s19
      %22 = dma.hbm_to_vmem [thread:$0]  %s18, 64, %s20, [#allocation3]
    $region5: #{tpu_custom_call.1} parent=1 // pred_fallthru
      _
    // Predicated region
    $region6: #{tpu_custom_call.1} parent=1 // pred_check
      _
    $region7: #{tpu_custom_call.1} parent=1 // pred_check_branch
      %24 = sbr.rel (0) target = $region9
    $region8: #{tpu_custom_call.1} parent=1 // pred_region
      %26 = vsyncadd [#allocation6], 0
      %s27 = sshll.u32 %s1, 4
      %s28 = int_to_ptr.hbm [resolvable:$true] %s27
      %s29 = sshll.u32 [#allocation5], 4
      %s30 = int_to_ptr.vmem [resolvable:$true] %s29
      %35 = dma.hbm_to_vmem [thread:$0]  %s28, 256, %s30, [#allocation6], 128, 128, 8
    $region9: #{tpu_custom_call.1} parent=1 // pred_fallthru
      _
    // Predicated region
    $region10: #{tpu_custom_call.1} parent=1 // pred_check
      _
    $region11: #{tpu_custom_call.1} parent=1 // pred_check_branch
      %37 = sbr.rel (0) target = $region13
    $region12: #{tpu_custom_call.1} parent=1 // pred_region
      _
    $region13: #{tpu_custom_call.1} parent=1 // pred_fallthru
      _
    // Predicated region
    $region14: #{tpu_custom_call.1} parent=1 // pred_check
      _
    $region15: #{tpu_custom_call.1} parent=1 // pred_check_branch
      %39 = sbr.rel (0) target = $region17
    $region16: #{tpu_custom_call.1} parent=1 // pred_region
      %41 = vsyncadd [#allocation6], 0
      %s43 = sshll.u32 %s3, 4
      %s44 = int_to_ptr.hbm [resolvable:$true] %s43
      %s45 = sshll.u32 [#allocation7], 4
      %s46 = int_to_ptr.vmem [resolvable:$true] %s45
      %48 = dma.hbm_to_vmem [thread:$0]  %s44, 64, %s46, [#allocation6]
    $region17: #{tpu_custom_call.1} parent=1 // pred_fallthru
      _
    // Predicated region
    $region18: #{tpu_custom_call.1} parent=1 // pred_check
      _
    $region19: #{tpu_custom_call.1} parent=1 // pred_check_branch
      %50 = sbr.rel (0) target = $region21
    $region20: #{tpu_custom_call.1} parent=1 // pred_region
      %52 = dma.done [#allocation3], 64
    $region21: #{tpu_custom_call.1} parent=1 // pred_fallthru
      _
    // Predicated region
    $region22: #{tpu_custom_call.1} parent=1 // pred_check
      _
    $region23: #{tpu_custom_call.1} parent=1 // pred_check_branch
      %54 = sbr.rel (0) target = $region25
    $region24: #{tpu_custom_call.1} parent=1 // pred_region
      %56 = dma.done [#allocation6], 256
    $region25: #{tpu_custom_call.1} parent=1 // pred_fallthru
      _
    // Predicated region
    $region26: #{tpu_custom_call.1} parent=1 // pred_check
      _
    $region27: #{tpu_custom_call.1} parent=1 // pred_check_branch
      %58 = sbr.rel (0) target = $region29
    $region28: #{tpu_custom_call.1} parent=1 // pred_region
      %60 = dma.done [#allocation6], 64
    $region29: #{tpu_custom_call.1} parent=1 // pred_fallthru
      _
    %v61 = vld [vmem:[#allocation2] sm:$0xf]
    %v62 = vld [vmem:[#allocation5] sm:$0xff]
    %v63 = vld [vmem:[#allocation5 + $0x8] sm:$0xff]
    %v64 = vld [vmem:[%s2] sm:$0x1]
    %v66 = vperm.slane %v64, 0
    %vm68 = vcmask 130048
    %v70 = vsel %vm68, %v61, 0
    %72 = vmatpush.msra.mxu0 0.0
    %73 = vmatpush.msra.mxu0 0.0
    %74 = vmatpush.msra.mxu0 0.0
    %75 = vmatpush.msra.mxu0 0.0
    %76 = vmatpush.msra.mxu0 0.0
    %77 = vmatpush.msra.mxu0 0.0
    %78 = vmatpush.msra.mxu0 0.0
    %79 = vmatpush.msra.mxu0 0.0
    %80 = vmatpush.msra.mxu0 0.0
    %81 = vmatpush.msra.mxu0 0.0
    %82 = vmatpush.msra.mxu0 0.0
    %83 = vmatpush.msra.mxu0 0.0
    %84 = vmatpush.msra.mxu0 0.0
    %85 = vmatpush.msra.mxu0 0.0
    %86 = vmatpush.msra.mxu0 %v63
    %87 = vmatpush.msra.mxu0 %v62
    %88 = vmatmul.f32.gmra.mxu0 %v70
    %v89 = vpop.f32.mrf.mxu0
    %v90 = vadd.f32 %v66, %v89
    %91 = vdwg.mxu0
    %v92 = vld [vmem:[#allocation7] sm:$0xf]
    %v93 = vadd.f32 %v92, %v90
    %v94 = vand.u32 2147483647, %v93
    %vm95 = vcmp.le.f32.partialorder %v94, 0.7853982
    %vm96 = vcmp.lt.s32.totalorder %v93, 0
    %v97 = vand.u32 %v93, 2139095040
    %v98 = vshrl.u32 %v97, 23
    %v99 = vsub.s32 %v98, 127
    %v100 = vand.u32 2147483647, %v93
    %v101 = vand.u32 %v100, 8388607
    %v102 = vor.u32 %v101, 8388608
    %v103 = vsub.s32 0, %v102
    %v104 = vadd.s32 %v99, 1
    %vm105 = vcmp.gt.s32.totalorder %v104, 0
    %v106 = vsel %vm105, %v104, 0
    %v107 = vshrl.u32 %v106, 5
    %v108 = vand.u32 %v106, 31
    %v109 = vsub.s32 32, %v108
    %v110 = vshrl.u32 683565275, %v109
    %v111 = vshll.u32 683565275, %v108
    %v112 = vshrl.u32 2475754826, %v109
    %v113 = vor.u32 %v111, %v112
    %v114 = vshll.u32 2475754826, %v108
    %v115 = vshrl.u32 2131351028, %v109
    %v116 = vor.u32 %v114, %v115
    %v117 = vshll.u32 2131351028, %v108
    %v118 = vshrl.u32 2102212464, %v109
    %v119 = vor.u32 %v117, %v118
    %v120 = vshll.u32 2102212464, %v108
    %v121 = vshrl.u32 920167782, %v109
    %v122 = vor.u32 %v120, %v121
    %v123 = vshll.u32 920167782, %v108
    %v124 = vshrl.u32 1326507024, %v109
    %v125 = vor.u32 %v123, %v124
    %vm126 = vcmp.lt.s32.totalorder %v107, 1
    %vm127 = vcmp.lt.s32.totalorder %v107, 2
    %vm128 = vcmp.lt.s32.totalorder %v107, 3
    %vm129 = vcmp.lt.s32.totalorder %v107, 4
    %v130 = vsel %vm126, %v110, %v113
    %v131 = vsel %vm129, %v119, 2102212464
    %v132 = vsel %vm128, %v116, %v131
    %v133 = vsel %vm127, %v130, %v132
    %v134 = vsel %vm126, %v113, %v116
    %v135 = vsel %vm129, %v122, 920167782
    %v136 = vsel %vm128, %v119, %v135
    %v137 = vsel %vm127, %v134, %v136
    %v138 = vsel %vm126, %v116, %v119
    %v139 = vsel %vm129, %v125, 1326507024
    %v140 = vsel %vm128, %v122, %v139
    %v141 = vsel %vm127, %v138, %v140
    %v142 = vshll.u32 %v102, 8
    %v143 = vand.u32 %v142, 65535
    %v144 = vshrl.u32 %v142, 16
    %v145 = vand.u32 %v141, 65535
    %v146 = vshrl.u32 %v141, 16
    %v147 = vmul.u32 %v143, %v145
    %v148 = vmul.u32 %v143, %v146
    %v149 = vmul.u32 %v144, %v145
    %v150 = vmul.u32 %v144, %v146
    %v151 = vshll.u32 %v148, 16
    %v152 = vshrl.u32 %v148, 16
    %v153 = vshll.u32 %v149, 16
    %v154 = vshrl.u32 %v149, 16
    %vm155 = vc.u32 %v147, %v151
    %v156 = vsel %vm155, 1, 0
    %v157 = vadd.s32 %v147, %v151
    %v158 = vadd.s32 %v150, %v156
    %vm159 = vc.u32 %v157, %v153
    %v160 = vsel %vm159, 1, 0
    %v161 = vadd.s32 %v157, %v153
    %v162 = vadd.s32 %v158, %v160
    %v163 = vadd.s32 %v162, %v152
    %v164 = vadd.s32 %v163, %v154
    %v165 = vand.u32 %v142, 65535
    %v166 = vshrl.u32 %v142, 16
    %v167 = vand.u32 %v137, 65535
    %v168 = vshrl.u32 %v137, 16
    %v169 = vmul.u32 %v165, %v167
    %v170 = vmul.u32 %v165, %v168
    %v171 = vmul.u32 %v166, %v167
    %v172 = vmul.u32 %v166, %v168
    %v173 = vshll.u32 %v170, 16
    %v174 = vshrl.u32 %v170, 16
    %v175 = vshll.u32 %v171, 16
    %v176 = vshrl.u32 %v171, 16
    %vm177 = vc.u32 %v169, %v173
    %v178 = vsel %vm177, 1, 0
    %v179 = vadd.s32 %v169, %v173
    %v180 = vadd.s32 %v172, %v178
    %vm181 = vc.u32 %v179, %v175
    %v182 = vsel %vm181, 1, 0
    %v183 = vadd.s32 %v179, %v175
    %v184 = vadd.s32 %v180, %v182
    %v185 = vadd.s32 %v184, %v174
    %v186 = vadd.s32 %v185, %v176
    %v187 = vmul.u32 %v142, %v133
    %v188 = vadd.s32 %v164, %v183
    %vm189 = vc.u32 %v164, %v183
    %v190 = vadd.s32 %v186, 1
    %v191 = vsel %vm189, %v190, %v186
    %v192 = vadd.s32 %v187, %v191
    %v193 = vadd.s32 %v192, 536870912
    %v194 = vshrl.u32 %v193, 30
    %v195 = vshll.u32 %v194, 30
    %v196 = vsub.s32 %v192, %v195
    %vm197 = vcmp.lt.s32.totalorder %v196, 0
    %v198 = vsub.s32 0, %v196
    %v199 = vsel %vm197, %v198, %v196
    %v200 = vclz %v199
    %v201 = vsub.s32 %v200, 2
    %vm202 = vcmp.gt.s32.totalorder 0, %v201
    %v203 = vsel %vm202, 0, %v201
    %v204 = vsub.s32 32, %v203
    %v205 = vshll.u32 %v196, %v203
    %v206 = vshrl.u32 %v188, %v204
    %v207 = vor.u32 %v205, %v206
    %v208 = vsub.s32 4294967266, %v203
    %v209 = vadd.s32 %v208, 127
    %v210 = vshll.u32 %v209, 23
    %v211 = vor.u32 4788187, %v210
    %v212 = vand.u32 2147483647, %v211
    %v214 = vcvt.s32.f32 %v207
    %v215 = vmul.f32 %v214, %v212
    %v216 = vxor.u32 %v215, 2147483648
    %v217 = vsel %vm96, %v216, %v215
    %v218 = vsub.s32 4, %v194
    %v219 = vsel %vm96, %v218, %v194
    %v220 = vsel %vm95, %v93, %v217
    %v221 = vsel %vm95, 0, %v219
    %v222 = vmul.f32 %v220, %v220
    %v223 = vmul.f32 %v222, -0.001358992
    %v224 = vadd.f32 %v223, 0.041655596
    %v225 = vmul.f32 %v222, %v224
    %v226 = vadd.f32 %v225, -0.4999988
    %v227 = vmul.f32 %v222, %v226
    %v228 = vadd.f32 1.0, %v227
    %v229 = vmul.f32 %v220, %v220
    %v230 = vmul.f32 %v229, -0.00019511016
    %v231 = vadd.f32 %v230, 0.008332121
    %v232 = vmul.f32 %v229, %v231
    %v233 = vadd.f32 %v232, -0.16666654
    %v234 = vmul.f32 %v229, %v233
    %v235 = vadd.f32 %v234, 1.0
    %v236 = vmul.f32 %v235, %v220
    %vm237 = vweird.f32 %v93
    %v238 = vadd.s32 %v221, 3
    %v239 = vand.u32 %v238, 3
    %vm240 = vcmp.lt.s32.totalorder %v239, 2
    %vm241 = vcmp.eq.s32.totalorder %v239, 0
    %v242 = vxor.u32 %v236, 2147483648
    %v243 = vsel %vm241, %v228, %v242
    %vm244 = vcmp.eq.s32.totalorder %v239, 2
    %v245 = vxor.u32 %v228, 2147483648
    %v246 = vsel %vm244, %v245, %v236
    %v247 = vsel %vm240, %v243, %v246
    %v248 = vsel %vm237, nan, %v247
    %249 = vst [vmem:[#allocation8] sm:$0xf] %v248
    // Predicated region
    $region30: #{tpu_custom_call.1} parent=1 // pred_check
      _
    $region31: #{tpu_custom_call.1} parent=1 // pred_check_branch
      %251 = sbr.rel (0) target = $region33
    $region32: #{tpu_custom_call.1} parent=1 // pred_region
      %253 = vsyncadd [#allocation4], 0
      %s255 = sshll.u32 [#allocation8], 4
      %s256 = int_to_ptr.vmem [resolvable:$true] %s255
      %s257 = sshll.u32 %s4, 4
      %s258 = int_to_ptr.hbm [resolvable:$true] %s257
      %260 = dma.vmem_to_hbm [thread:$0]  %s256, 64, %s258, [#allocation4]
    $region33: #{tpu_custom_call.1} parent=1 // pred_fallthru
      _
    // Predicated region
    $region34: #{tpu_custom_call.1} parent=1 // pred_check
      _
    $region35: #{tpu_custom_call.1} parent=1 // pred_check_branch
      %262 = sbr.rel (0) target = $region37
    $region36: #{tpu_custom_call.1} parent=1 // pred_region
      %264 = dma.done [#allocation4], 64
    $region37: #{tpu_custom_call.1} parent=1 // pred_fallthru
      _
    %265 = vsyncpa [#allocation3], 1
    %266 = vsyncpa [#allocation6], 1
    %267 = vsyncpa [#allocation4], 1

</llo_original>
